<compile_context>
chip_gen: v6e
topology: v6e:2x2x1
jax: 0.10.0
libtpu: 0.0.40
codegen_flags: <defaults>
</compile_context>

<pallas_src>
import functools

import jax
import jax.numpy as jnp
from jax import lax
from jax.experimental import pallas as pl
from jax.experimental.pallas import tpu as pltpu

LANE = 128                      # vreg lane width
CHUNK_ROWS = 1024               # inner accumulation chunk (1024*128*4 B = 512 KiB f32)
MAX_TILE_BYTES = 4 * 1024 * 1024  # target bytes per input block (per input)


def _round_up(x, m):
    return -(-x // m) * m


def _num_tensorcores():
    """2 TensorCores per chip on v7x-class parts; 1 on v5e/v6e.  Using 2 on a
    1-TC chip is harmless (one clamped tile re-fetch), so default to 2 if unsure."""
    try:
        kind = jax.devices()[0].device_kind.lower()
    except Exception:
        return 2
    if ("v5e" in kind) or ("v5 lite" in kind) or ("v5litepod" in kind) or ("v6" in kind):
        return 1
    return 2


def _charbonnier_kernel(x_ref, y_ref, o_ref, acc_ref, *, eps, rows, tile_rows,
                        chunk_rows, blocks_per_core, nblocks):
    c = pl.program_id(0)   # core shard ("parallel" axis)
    i = pl.program_id(1)   # block within shard ("arbitrary" reduction axis)

    @pl.when(i == 0)
    def _():
        acc_ref[...] = jnp.zeros_like(acc_ref)

    # Logical (unclamped) block index.  int32 math -> tensors < 2^31 elements
    # (asserted in the wrapper).
    blk = c * blocks_per_core + i

    nchunks = tile_rows // chunk_rows
    last_rows = rows - (nblocks - 1) * tile_rows   # valid rows in the final block
    full_last = (last_rows == tile_rows)           # trace-time specialization

    def partial_sum(masked):
        def chunk_sum(r0, carry):
            xs = x_ref[pl.ds(r0, chunk_rows), :].astype(jnp.float32)
            ys = y_ref[pl.ds(r0, chunk_rows), :].astype(jnp.float32)
            d = xs - ys
            v = jnp.sqrt(d * d + jnp.float32(eps))
            if masked:
                row = lax.broadcasted_iota(jnp.int32, (chunk_rows, LANE), 0) + r0
                v = jnp.where(row < last_rows, v, jnp.float32(0.0))
            # Cross-vreg VALU adds into an (8, LANE) partial; no per-step
            # sublane collapse / relayout.
            return carry + jnp.sum(v.reshape(chunk_rows // 8, 8, LANE), axis=0)

        init = jnp.zeros((8, LANE), jnp.float32)
        if nchunks == 1:
            return chunk_sum(0, init)

        def body(t, carry):
            return chunk_sum(pl.multiple_of(t * chunk_rows, chunk_rows), carry)

        return lax.fori_loop(0, nchunks, body, init)

    if full_last:
        # Every in-range block is full: no mask anywhere in the hot path.
        @pl.when(blk < nblocks)
        def _():
            acc_ref[...] += partial_sum(masked=False)
    else:
        @pl.when(blk < nblocks - 1)
        def _():
            acc_ref[...] += partial_sum(masked=False)

        @pl.when(blk == nblocks - 1)
        def _():
            acc_ref[...] += partial_sum(masked=True)

    @pl.when(i == pl.num_programs(1) - 1)
    def _():
        o_ref[...] = acc_ref[...].reshape(1, 8, LANE)


def charbonnier_loss(x, y, eps=1e-9):
    """Equivalent of torch: sum(sqrt((x - y)^2 + eps)) over all elements."""
    assert x.shape == y.shape, "x and y must have the same shape"
    n = int(x.size)
    assert 0 < n < 2**31, "kernel uses int32 offsets; requires 0 < n < 2^31"

    xf = x.reshape(-1)
    yf = y.reshape(-1)

    n_body = (n // LANE) * LANE
    tail = n - n_body

    # <128-element ragged tail: tiny plain-JAX sum (no full-array padding/copy).
    tail_loss = None
    if tail:
        dt = xf[n_body:].astype(jnp.float32) - yf[n_body:].astype(jnp.float32)
        tail_loss = jnp.sum(jnp.sqrt(dt * dt + jnp.float32(eps)))

    if n_body == 0:
        return tail_loss

    rows = n_body // LANE
    # Free reshape when n is lane-aligned; otherwise the lane-aligned body only.
    x2 = (xf if tail == 0 else xf[:n_body]).reshape(rows, LANE)
    y2 = (yf if tail == 0 else yf[:n_body]).reshape(rows, LANE)

    # Dtype-aware tiling: sublane multiple per dtype, block bytes ~constant.
    def _sublane(dt):
        return {4: 8, 2: 16, 1: 32}.get(jnp.dtype(dt).itemsize, 8)
    sublane_mult = max(_sublane(x.dtype), _sublane(y.dtype))
    bytes_per_row = LANE * (jnp.dtype(x.dtype).itemsize + jnp.dtype(y.dtype).itemsize)
    max_tile_rows = max(CHUNK_ROWS,
                        (2 * MAX_TILE_BYTES // bytes_per_row) // CHUNK_ROWS * CHUNK_ROWS)

    if rows >= CHUNK_ROWS:
        tile_rows = min(max_tile_rows, _round_up(rows, CHUNK_ROWS))
        chunk_rows = CHUNK_ROWS
    else:
        tile_rows = _round_up(rows, sublane_mult)
        chunk_rows = tile_rows

    nblocks = pl.cdiv(rows, tile_rows)
    num_cores = _num_tensorcores()
    blocks_per_core = pl.cdiv(nblocks, num_cores)

    def in_map(c, i):
        # Clamp so out-of-range logical blocks re-fetch a valid tile; the kernel
        # skips their contribution via pl.when(blk < nblocks).
        return (jnp.minimum(c * blocks_per_core + i, nblocks - 1), 0)

    kernel = functools.partial(
        _charbonnier_kernel, eps=float(eps), rows=rows, tile_rows=tile_rows,
        chunk_rows=chunk_rows, blocks_per_core=blocks_per_core, nblocks=nblocks)

    partials = pl.pallas_call(
        kernel,
        out_shape=jax.ShapeDtypeStruct((num_cores, 8, LANE), jnp.float32),
        grid_spec=pltpu.PrefetchScalarGridSpec(
            num_scalar_prefetch=0,
            grid=(num_cores, blocks_per_core),
            in_specs=[
                pl.BlockSpec((tile_rows, LANE), in_map),
                pl.BlockSpec((tile_rows, LANE), in_map),
            ],
            out_specs=pl.BlockSpec((1, 8, LANE), lambda c, i: (c, 0, 0)),
            scratch_shapes=[pltpu.VMEM((8, LANE), jnp.float32)],
        ),
        compiler_params=pltpu.CompilerParams(
            dimension_semantics=("parallel", "arbitrary"),
            vmem_limit_bytes=32 * 1024 * 1024,
        ),
    )(x2, y2)

    body_loss = jnp.sum(partials)
    return body_loss if tail_loss is None else body_loss + tail_loss


if __name__ == "__main__":
    key = jax.random.PRNGKey(0)
    kx, ky = jax.random.split(key)

    # NCHW-like small input (lane-aligned case).
    x = jax.random.normal(kx, (2, 4, 16, 16), dtype=jnp.float32)
    y = jax.random.normal(ky, (2, 4, 16, 16), dtype=jnp.float32)
    loss = jax.block_until_ready(charbonnier_loss(x, y, eps=1e-9))
    d = x - y
    ref = jnp.sum(jnp.sqrt(d * d + 1e-9))
    assert jnp.allclose(loss, ref, rtol=1e-5, atol=1e-5), (loss, ref)

    # Ragged case (exercises partial-block masking + lane tail path).
    kx2, ky2 = jax.random.split(kx)
    xr = jax.random.normal(kx2, (3, 5, 7, 11), dtype=jnp.float32)
    yr = jax.random.normal(ky2, (3, 5, 7, 11), dtype=jnp.float32)
    loss_r = jax.block_until_ready(charbonnier_loss(xr, yr, eps=1e-9))
    dr = xr - yr
    ref_r = jnp.sum(jnp.sqrt(dr * dr + 1e-9))
    assert jnp.allclose(loss_r, ref_r, rtol=1e-5, atol=1e-5), (loss_r, ref_r)

    print("KERNEL_OK")
</pallas_src>

<mosaic_0001>
module attributes {stable_mosaic.version = 11 : i64} {
  func.func @_charbonnier_kernel(%arg0: i32, %arg1: i32, %arg2: memref<16x128xf32, #tpu.memory_space<vmem>>, %arg3: memref<16x128xf32, #tpu.memory_space<vmem>>, %arg4: memref<1x8x128xf32, #tpu.memory_space<vmem>>, %arg5: memref<8x128xf32, #tpu.memory_space<vmem>>) attributes {dimension_semantics = [#tpu.dimension_semantics<parallel>, #tpu.dimension_semantics<arbitrary>], iteration_bounds = array<i64: 2, 1>, scalar_prefetch = 0 : i64, scratch_operands = 1 : i64, tpu.core_type = #tpu.core_type<tc>, window_params = [{transform_indices = @transform_0, window_bounds = array<i64: 16, 128>}, {transform_indices = @transform_1, window_bounds = array<i64: 16, 128>}, {transform_indices = @transform_2, window_bounds = array<i64: 1, 8, 128>}]} {
    %c0_i32 = arith.constant 0 : i32
    %0 = arith.cmpi eq, %arg1, %c0_i32 : i32
    %1 = arith.extui %0 : i1 to i32
    %c0_i32_0 = arith.constant 0 : i32
    %2 = arith.cmpi ne, %1, %c0_i32_0 : i32
    scf.if %2 {
      %cst = arith.constant 0.000000e+00 : f32
      %11 = vector.broadcast %cst : f32 to vector<8x128xf32>
      %c0 = arith.constant 0 : index
      %c0_5 = arith.constant 0 : index
      %12 = vector.load %arg5[%c0, %c0_5] : memref<8x128xf32, #tpu.memory_space<vmem>>, vector<8x128xf32>
      tpu.vector_store %arg5[%c0, %c0_5], %11 {strides = array<i32>} : memref<8x128xf32, #tpu.memory_space<vmem>>, vector<8x128xf32>,
    } else {
    }
    %c1_i32 = arith.constant 1 : i32
    %3 = arith.muli %arg0, %c1_i32 : i32
    %4 = arith.addi %3, %arg1 : i32
    %c1_i32_1 = arith.constant 1 : i32
    %5 = arith.cmpi slt, %4, %c1_i32_1 : i32
    %6 = arith.extui %5 : i1 to i32
    %c0_i32_2 = arith.constant 0 : i32
    %7 = arith.cmpi ne, %6, %c0_i32_2 : i32
    scf.if %7 {
      %c0 = arith.constant 0 : index
      %c0_5 = arith.constant 0 : index
      %11 = vector.load %arg5[%c0, %c0_5] : memref<8x128xf32, #tpu.memory_space<vmem>>, vector<8x128xf32>
      %cst = arith.constant 0.000000e+00 : f32
      %12 = vector.broadcast %cst : f32 to vector<8x128xf32>
      %c0_6 = arith.constant 0 : index
      %c0_7 = arith.constant 0 : index
      %13 = vector.load %arg2[%c0_6, %c0_7] : memref<16x128xf32, #tpu.memory_space<vmem>>, vector<16x128xf32>
      %c0_8 = arith.constant 0 : index
      %c0_9 = arith.constant 0 : index
      %14 = vector.load %arg3[%c0_8, %c0_9] : memref<16x128xf32, #tpu.memory_space<vmem>>, vector<16x128xf32>
      %15 = arith.subf %13, %14 : vector<16x128xf32>
      %16 = arith.mulf %15, %15 : vector<16x128xf32>
      %cst_10 = arith.constant 9.99999971E-10 : f32
      %17 = vector.broadcast %cst_10 : f32 to vector<16x128xf32>
      %18 = arith.addf %16, %17 : vector<16x128xf32>
      %19 = math.sqrt %18 : vector<16x128xf32>
      %20 = vector.shape_cast %19 : vector<16x128xf32> to vector<2x8x128xf32>
      %cst_11 = arith.constant dense<0.000000e+00> : vector<8x128xf32>
      %21 = vector.multi_reduction <add>, %20, %cst_11 [0] : vector<2x8x128xf32> to vector<8x128xf32>
      %22 = arith.addf %12, %21 : vector<8x128xf32>
      %23 = arith.addf %11, %22 : vector<8x128xf32>
      %c0_12 = arith.constant 0 : index
      %c0_13 = arith.constant 0 : index
      %24 = vector.load %arg5[%c0_12, %c0_13] : memref<8x128xf32, #tpu.memory_space<vmem>>, vector<8x128xf32>
      tpu.vector_store %arg5[%c0_12, %c0_13], %23 {strides = array<i32>} : memref<8x128xf32, #tpu.memory_space<vmem>>, vector<8x128xf32>,
    } else {
    }
    %c0_i32_3 = arith.constant 0 : i32
    %8 = arith.cmpi eq, %arg1, %c0_i32_3 : i32
    %9 = arith.extui %8 : i1 to i32
    %c0_i32_4 = arith.constant 0 : i32
    %10 = arith.cmpi ne, %9, %c0_i32_4 : i32
    scf.if %10 {
      %c0 = arith.constant 0 : index
      %c0_5 = arith.constant 0 : index
      %11 = vector.load %arg5[%c0, %c0_5] : memref<8x128xf32, #tpu.memory_space<vmem>>, vector<8x128xf32>
      %12 = vector.shape_cast %11 : vector<8x128xf32> to vector<1x8x128xf32>
      %c0_6 = arith.constant 0 : index
      %c0_7 = arith.constant 0 : index
      %c0_8 = arith.constant 0 : index
      %13 = vector.load %arg4[%c0_6, %c0_7, %c0_8] : memref<1x8x128xf32, #tpu.memory_space<vmem>>, vector<1x8x128xf32>
      tpu.vector_store %arg4[%c0_6, %c0_7, %c0_8], %12 {strides = array<i32>} : memref<1x8x128xf32, #tpu.memory_space<vmem>>, vector<1x8x128xf32>,
    } else {
    }
    return
  }
  func.func @transform_0(%arg0: i32, %arg1: i32) -> (i32, i32) {
    %c1_i32 = arith.constant 1 : i32
    %0 = arith.muli %arg0, %c1_i32 : i32
    %1 = arith.addi %0, %arg1 : i32
    %c0_i32 = arith.constant 0 : i32
    %2 = arith.minsi %1, %c0_i32 : i32
    %c0_i32_0 = arith.constant 0 : i32
    %c0_i32_1 = arith.constant 0 : i32
    return %2, %c0_i32_0 : i32, i32
  }
  func.func @transform_1(%arg0: i32, %arg1: i32) -> (i32, i32) {
    %c1_i32 = arith.constant 1 : i32
    %0 = arith.muli %arg0, %c1_i32 : i32
    %1 = arith.addi %0, %arg1 : i32
    %c0_i32 = arith.constant 0 : i32
    %2 = arith.minsi %1, %c0_i32 : i32
    %c0_i32_0 = arith.constant 0 : i32
    %c0_i32_1 = arith.constant 0 : i32
    return %2, %c0_i32_0 : i32, i32
  }
  func.func @transform_2(%arg0: i32, %arg1: i32) -> (i32, i32, i32) {
    %c0_i32 = arith.constant 0 : i32
    %c0_i32_0 = arith.constant 0 : i32
    %c0_i32_1 = arith.constant 0 : i32
    return %arg0, %c0_i32, %c0_i32_0 : i32, i32, i32
  }
}

</mosaic_0001>

<llo_original>
// kernel: tpu_custom_call.1
$region0: #{tpu_custom_call.1}
  #allocation0 [shape = 'u32[]', space=smem, size = 0x4, offset = 0x4, fixed_abs, tag = 'smem constant byte address 0x4 - core index']
  #allocation1 [shape = 'u32[144,128]{1,0:T(1,128)}', space=vmem, size = 0x12000, scoped, tag = 'internal scratch']
  #allocation2 [shape = 'f32[8,128]{1,0:T(8,128)}', space=vmem, size = 0x1000, scoped, tag = 'scratch operand']
  %s0 = inlined_call_operand.hbm [shape: f32[16,128], index: 0, kind: input, shape index: {}]
  %s1 = inlined_call_operand.hbm [shape: f32[16,128], index: 1, kind: input, shape index: {}]
  %s2 = inlined_call_operand.hbm [shape: f32[2,8,128], index: 2, kind: output, shape index: {}]
  %s3 = sld [smem:[#allocation0]]
  $region61: #{tpu_custom_call.1} parent=0
    _
  %s5 = ssub.s32 1, %s3
  %s6 = scalar_select 0, %s5, %s3
  $region1: #{tpu_custom_call.1} parent=0
    #allocation3 [shape = 'u8[16384]{0}', space=vmem, size = 0x4000, scoped, tag = 'input window, operand 0']
    #allocation4 [shape = 's32[2]{0}', space=sflag, size = 0x8, scoped, tag = 'scoped memory for tpu_custom_call.1']
    #allocation5 [shape = 's32[2]{0}', space=sflag, size = 0x8, scoped, tag = 'scoped memory for tpu_custom_call.1']
    #allocation6 [shape = 'u8[16384]{0}', space=vmem, size = 0x4000, scoped, tag = 'input window, operand 1']
    #allocation7 [shape = 's32[2]{0}', space=sflag, size = 0x8, scoped, tag = 'scoped memory for tpu_custom_call.1']
    #allocation8 [shape = 'u8[8192]{0}', space=vmem, size = 0x2000, scoped, tag = 'output window, operand 0']
    %7 = vsyncpa [#allocation4], 0
    %s8 = scalar_lea.sflag [#allocation4], 1
    %9 = vsyncpa %s8, 0
    %10 = vsyncpa [#allocation7], 0
    %s11 = scalar_lea.sflag [#allocation7], 1
    %12 = vsyncpa %s11, 0
    %13 = vsyncpa [#allocation5], 0
    %s14 = scalar_lea.sflag [#allocation5], 1
    %15 = vsyncpa %s14, 0
    loop: start=0, step=1, limit=4
    $region2: #{tpu_custom_call.1} parent=1 // loop_pre_header
      _
    $region3: #{tpu_custom_call.1} parent=1 // loop_header
      %s17 = sphi 0, %s21
      %p18 = scmp.ge.s32.totalorder %s17, 4
      %s24 = sphi 0, %s36
      %s25 = sphi 0, %s32
      %s26 = sphi 0, %s24
      %s27 = sphi 0, %s25
      %s28 = sphi 0, %s26
      %s29 = sphi 0, %s27
      %s45 = sphi 0, %s47
      %s48 = sphi 0, %s45
      %s49 = sphi 0, %s48
      %s65 = sphi 0, %s49
      %s77 = sphi 0, %s79
      %s80 = sphi 0, %s77
      %s81 = sphi 0, %s80
      %s97 = sphi 0, %s81
      %s103 = sphi 0, %s105
      %s106 = sphi 0, %s103
      %s107 = sphi 0, %s106
      %s123 = sphi 0, %s107
    $region4: #{tpu_custom_call.1} parent=1 // loop_header_branch
      %20 = sbr.rel (%p18) target = $region8
    $region5: #{tpu_custom_call.1} parent=1 // loop_body
      %s22 = ssub.s32 %s17, 1
      %s23 = ssub.s32 %s17, 2
      %s30 = sadd.s32 1, %s25
      %p31 = scmp.ge.s32.totalorder %s30, 1
      %s32 = scalar_select %p31, 0, %s30
      %s33 = sadd.s32 1, %s24
      %s34 = scalar_select %p31, %s33, %s24
      %p35 = scmp.ge.s32.totalorder %s34, 2
      %s36 = scalar_select %p35, 0, %s34
      %s37 = sadd.s32 %s24, %s25
      %p38 = scmp.lt.s32.totalorder %s37, 0
      %s39 = scalar_select %p38, %s37, 0
      %s40 = sadd.s32 %s36, %s32
      %p41 = scmp.lt.s32.totalorder %s40, 0
      %s42 = scalar_select %p41, %s40, 0
      %s43 = ssub.s32 %s39, %s42
      %p44 = scmp.eq.s32.totalorder %s43, 0
      %s46 = sadd.s32 %s45, 1
      %s47 = scalar_select %p44, %s45, %s46
      %p50 = pneg %p44
      %p51 = scmp.eq.s32.totalorder %s17, 1
      %p52 = por %p50, %p51
      %p53 = scmp.ne.s32.totalorder %s45, %s48
      %p54 = scmp.eq.s32.totalorder %s17, 0
      %p55 = por %p53, %p54
      %p56 = scmp.ne.s32.totalorder %s45, %s48
      %p57 = scmp.eq.s32.totalorder %s22, 1
      %p58 = por %p56, %p57
      %p59 = scmp.ne.s32.totalorder %s48, %s49
      %p60 = scmp.eq.s32.totalorder %s22, 0
      %p61 = por %p59, %p60
      %p62 = scmp.ne.s32.totalorder %s48, %s49
      %p63 = scmp.eq.s32.totalorder %s23, 1
      %p64 = por %p62, %p63
      %p66 = scmp.ne.s32.totalorder %s49, %s65
      %p67 = scmp.eq.s32.totalorder %s23, 0
      %p68 = por %p66, %p67
      %s69 = sadd.s32 %s24, %s25
      %p70 = scmp.lt.s32.totalorder %s69, 0
      %s71 = scalar_select %p70, %s69, 0
      %s72 = sadd.s32 %s36, %s32
      %p73 = scmp.lt.s32.totalorder %s72, 0
      %s74 = scalar_select %p73, %s72, 0
      %s75 = ssub.s32 %s71, %s74
      %p76 = scmp.eq.s32.totalorder %s75, 0
      %s78 = sadd.s32 %s77, 1
      %s79 = scalar_select %p76, %s77, %s78
      %p82 = pneg %p76
      %p83 = scmp.eq.s32.totalorder %s17, 1
      %p84 = por %p82, %p83
      %p85 = scmp.ne.s32.totalorder %s77, %s80
      %p86 = scmp.eq.s32.totalorder %s17, 0
      %p87 = por %p85, %p86
      %p88 = scmp.ne.s32.totalorder %s77, %s80
      %p89 = scmp.eq.s32.totalorder %s22, 1
      %p90 = por %p88, %p89
      %p91 = scmp.ne.s32.totalorder %s80, %s81
      %p92 = scmp.eq.s32.totalorder %s22, 0
      %p93 = por %p91, %p92
      %p94 = scmp.ne.s32.totalorder %s80, %s81
      %p95 = scmp.eq.s32.totalorder %s23, 1
      %p96 = por %p94, %p95
      %p98 = scmp.ne.s32.totalorder %s81, %s97
      %p99 = scmp.eq.s32.totalorder %s23, 0
      %p100 = por %p98, %p99
      %s101 = ssub.s32 %s24, %s36
      %p102 = scmp.eq.s32.totalorder %s101, 0
      %s104 = sadd.s32 %s103, 1
      %s105 = scalar_select %p102, %s103, %s104
      %p108 = pneg %p102
      %p109 = scmp.eq.s32.totalorder %s17, 1
      %p110 = por %p108, %p109
      %p111 = scmp.ne.s32.totalorder %s103, %s106
      %p112 = scmp.eq.s32.totalorder %s17, 0
      %p113 = por %p111, %p112
      %p114 = scmp.ne.s32.totalorder %s103, %s106
      %p115 = scmp.eq.s32.totalorder %s22, 1
      %p116 = por %p114, %p115
      %p117 = scmp.ne.s32.totalorder %s106, %s107
      %p118 = scmp.eq.s32.totalorder %s22, 0
      %p119 = por %p117, %p118
      %p120 = scmp.ne.s32.totalorder %s106, %s107
      %p121 = scmp.eq.s32.totalorder %s23, 1
      %p122 = por %p120, %p121
      %p124 = scmp.ne.s32.totalorder %s107, %s123
      %p125 = scmp.eq.s32.totalorder %s23, 0
      %p126 = por %p124, %p125
      %p127 = scmp.le.s32.totalorder 1, %s17
      %p128 = scmp.lt.s32.totalorder %s17, 3
      %p129 = pnand %p127, %p128
      %p130 = pneg %p129
      // Predicated region
      $region9: #{tpu_custom_call.1} parent=5 // pred_check
        _
      $region10: #{tpu_custom_call.1} parent=5 // pred_check_branch
        %132 = sbr.rel (%p129) target = $region12
      $region11: #{tpu_custom_call.1} parent=5 // pred_region
        %s133 = ssub.s32 %s17, 1
      $region12: #{tpu_custom_call.1} parent=5 // pred_fallthru
        _
      %p134 = scmp.lt.s32.totalorder %s17, 2
      // Predicated region
      $region13: #{tpu_custom_call.1} parent=5 // pred_check
        %p135 = pneg %p134
      $region14: #{tpu_custom_call.1} parent=5 // pred_check_branch
        %137 = sbr.rel (%p135) target = $region16
      $region15: #{tpu_custom_call.1} parent=5 // pred_region
        // Predicated region
        $region17: #{tpu_custom_call.1} parent=15 // pred_check
          %p138 = pneg %p55
        $region18: #{tpu_custom_call.1} parent=15 // pred_check_branch
          %140 = sbr.rel (%p138) target = $region20
        $region19: #{tpu_custom_call.1} parent=15 // pred_region
          %s141 = sand.u32 %s45, 1
          %s142 = scalar_lea.sflag [#allocation4], %s141
          %s143 = sand.u32 %s45, 1
          %s144 = smul.addr %s143, 16
          %s145 = scalar_lea.vmem [#allocation3], %s144
          %s146 = sadd.s32 %s24, %s25
          %p147 = scmp.lt.s32.totalorder %s146, 0
          %s148 = scalar_select %p147, %s146, 0
          %s149 = smul.u32 2, %s148
          %s151 = ssub.s32 256, 256
          %152 = vsyncadd %s142, %s151
          %s153 = smul.addr %s149, 128
          %s154 = scalar_lea.hbm %s0, %s153
          %s155 = sshll.u32 %s145, 4
          %s156 = int_to_ptr.vmem [resolvable:$true] %s155
          %161 = dma.hbm_to_vmem [thread:$0]  %s154, 256, %s156, %s142, 128, 128, 8
        $region20: #{tpu_custom_call.1} parent=15 // pred_fallthru
          _
        // Predicated region
        $region21: #{tpu_custom_call.1} parent=15 // pred_check
          %p162 = pneg %p87
        $region22: #{tpu_custom_call.1} parent=15 // pred_check_branch
          %164 = sbr.rel (%p162) target = $region24
        $region23: #{tpu_custom_call.1} parent=15 // pred_region
          %s165 = sand.u32 %s77, 1
          %s166 = scalar_lea.sflag [#allocation7], %s165
          %s167 = sand.u32 %s77, 1
          %s168 = smul.addr %s167, 16
          %s169 = scalar_lea.vmem [#allocation6], %s168
          %s170 = sadd.s32 %s24, %s25
          %p171 = scmp.lt.s32.totalorder %s170, 0
          %s172 = scalar_select %p171, %s170, 0
          %s173 = smul.u32 2, %s172
          %s175 = ssub.s32 256, 256
          %176 = vsyncadd %s166, %s175
          %s177 = smul.addr %s173, 128
          %s178 = scalar_lea.hbm %s1, %s177
          %s179 = sshll.u32 %s169, 4
          %s180 = int_to_ptr.vmem [resolvable:$true] %s179
          %185 = dma.hbm_to_vmem [thread:$0]  %s178, 256, %s180, %s166, 128, 128, 8
        $region24: #{tpu_custom_call.1} parent=15 // pred_fallthru
          _
      $region16: #{tpu_custom_call.1} parent=5 // pred_fallthru
        _
      %p186 = scmp.le.s32.totalorder 1, %s17
      %p187 = scmp.lt.s32.totalorder %s17, 3
      %p188 = pnand %p186, %p187
      %p189 = pneg %p188
      // Predicated region
      $region25: #{tpu_custom_call.1} parent=5 // pred_check
        _
      $region26: #{tpu_custom_call.1} parent=5 // pred_check_branch
        %191 = sbr.rel (%p188) target = $region28
      $region27: #{tpu_custom_call.1} parent=5 // pred_region
        %s192 = ssub.s32 %s17, 1
        %s193 = sand.u32 %s48, 1
        %s194 = scalar_lea.sflag [#allocation4], %s193
        %s195 = sand.u32 %s48, 1
        %s196 = smul.addr %s195, 16
        %s197 = scalar_lea.vmem [#allocation3], %s196
        // Predicated region
        $region29: #{tpu_custom_call.1} parent=27 // pred_check
          %p198 = pneg %p61
        $region30: #{tpu_custom_call.1} parent=27 // pred_check_branch
          %200 = sbr.rel (%p198) target = $region32
        $region31: #{tpu_custom_call.1} parent=27 // pred_region
          %201 = dma.done %s194, 256
        $region32: #{tpu_custom_call.1} parent=27 // pred_fallthru
          _
        %s202 = sand.u32 %s80, 1
        %s203 = scalar_lea.sflag [#allocation7], %s202
        %s204 = sand.u32 %s80, 1
        %s205 = smul.addr %s204, 16
        %s206 = scalar_lea.vmem [#allocation6], %s205
        // Predicated region
        $region33: #{tpu_custom_call.1} parent=27 // pred_check
          %p207 = pneg %p93
        $region34: #{tpu_custom_call.1} parent=27 // pred_check_branch
          %209 = sbr.rel (%p207) target = $region36
        $region35: #{tpu_custom_call.1} parent=27 // pred_region
          %210 = dma.done %s203, 256
        $region36: #{tpu_custom_call.1} parent=27 // pred_fallthru
          _
        %s211 = sand.u32 %s48, 1
        %s212 = scalar_lea.sflag [#allocation4], %s211
        %s213 = sand.u32 %s48, 1
        %s214 = smul.addr %s213, 16
        %s215 = scalar_lea.vmem [#allocation3], %s214
        %p216 = pneg %p61
        %p217 = pneg %p58
        %s218 = sand.u32 %s80, 1
        %s219 = scalar_lea.sflag [#allocation7], %s218
        %s220 = sand.u32 %s80, 1
        %s221 = smul.addr %s220, 16
        %s222 = scalar_lea.vmem [#allocation6], %s221
        %p223 = pneg %p93
        %p224 = pneg %p90
        %p225 = pneg %p119
        %p226 = pneg %p116
        %s227 = sand.u32 %s106, 1
        %s228 = scalar_lea.sflag [#allocation5], %s227
        %s229 = sand.u32 %s106, 1
        %s230 = smul.addr %s229, 8
        %s231 = scalar_lea.vmem [#allocation8], %s230
        %s232 = sadd.s32 %s26, %s27
        %p233 = scmp.lt.s32.totalorder %s232, 0
        %s234 = scalar_select %p233, %s232, 0
        %s235 = smul.u32 2, %s234
        %s236 = sadd.s32 %s26, %s27
        %p237 = scmp.lt.s32.totalorder %s236, 0
        %s238 = scalar_select %p237, %s236, 0
        %s239 = smul.u32 2, %s238
        %p240 = scmp.eq.s32.totalorder %s27, 0
        // Predicated region
        $region37: #{tpu_custom_call.1} parent=27 // pred_check
          %p241 = pneg %p240
        $region38: #{tpu_custom_call.1} parent=27 // pred_check_branch
          %243 = sbr.rel (%p241) target = $region40
        $region39: #{tpu_custom_call.1} parent=27 // pred_region
          %244 = vst [vmem:[#allocation2] sm:$0xff] 0.0
        $region40: #{tpu_custom_call.1} parent=27 // pred_fallthru
          _
        %s245 = sadd.s32 %s26, %s27
        %p246 = scmp.lt.s32.totalorder %s245, 1
        // Predicated region
        $region41: #{tpu_custom_call.1} parent=27 // pred_check
          %p247 = pneg %p246
        $region42: #{tpu_custom_call.1} parent=27 // pred_check_branch
          %249 = sbr.rel (%p247) target = $region44
        $region43: #{tpu_custom_call.1} parent=27 // pred_region
          %v250 = vld [vmem:[#allocation2] sm:$0xff]
          %v251 = vld [vmem:[%s197] sm:$0xff]
          %v252 = vld [vmem:[%s197 + $0x8] sm:$0xff]
          %v253 = vld [vmem:[%s206] sm:$0xff]
          %v254 = vld [vmem:[%s206 + $0x8] sm:$0xff]
          %v255 = vsub.f32 %v251, %v253
          %v256 = vsub.f32 %v252, %v254
          %v257 = vmul.f32 %v255, %v255
          %v258 = vmul.f32 %v256, %v256
          %v259 = vadd.f32 %v257, 1e-09
          %v260 = vadd.f32 %v258, 1e-09
          %v261 = vrsqrt.pop %v259
          %v262 = vmul.f32 %v259, %v261
          %vm263 = vcmp.eq.f32.partialorder %v259, inf
          %v264 = vsel %vm263, %v259, %v262
          %vm265 = vcmp.eq.f32.partialorder %v259, 0.0
          %v266 = vand.u32 %v259, 2147483648
          %v267 = vsel %vm265, %v266, %v264
          %v268 = vrsqrt.pop %v260
          %v269 = vmul.f32 %v260, %v268
          %vm270 = vcmp.eq.f32.partialorder %v260, inf
          %v271 = vsel %vm270, %v260, %v269
          %vm272 = vcmp.eq.f32.partialorder %v260, 0.0
          %v273 = vand.u32 %v260, 2147483648
          %v274 = vsel %vm272, %v273, %v271
          %v275 = vadd.f32 %v267, %v274
          %v276 = vadd.f32 %v275, 0.0
          %v277 = vadd.f32 %v250, %v276
          %278 = vst [vmem:[#allocation2] sm:$0xff] %v277
        $region44: #{tpu_custom_call.1} parent=27 // pred_fallthru
          _
        // Predicated region
        $region45: #{tpu_custom_call.1} parent=27 // pred_check
          %p279 = pneg %p240
        $region46: #{tpu_custom_call.1} parent=27 // pred_check_branch
          %281 = sbr.rel (%p279) target = $region48
        $region47: #{tpu_custom_call.1} parent=27 // pred_region
          %v282 = vld [vmem:[#allocation2] sm:$0xff]
          %283 = vst [vmem:[%s231] sm:$0xff] %v282
        $region48: #{tpu_custom_call.1} parent=27 // pred_fallthru
          _
        %s284 = sand.u32 %s106, 1
        %s285 = scalar_lea.sflag [#allocation5], %s284
        %s286 = sand.u32 %s106, 1
        %s287 = smul.addr %s286, 8
        %s288 = scalar_lea.vmem [#allocation8], %s287
        // Predicated region
        $region49: #{tpu_custom_call.1} parent=27 // pred_check
          %p289 = pneg %p116
        $region50: #{tpu_custom_call.1} parent=27 // pred_check_branch
          %291 = sbr.rel (%p289) target = $region52
        $region51: #{tpu_custom_call.1} parent=27 // pred_region
          %s293 = ssub.s32 128, 128
          %294 = vsyncadd %s285, %s293
          %s295 = smul.addr %s26, 128
          %s296 = scalar_lea.hbm %s2, %s295
          %s298 = sshll.u32 %s288, 4
          %s299 = int_to_ptr.vmem [resolvable:$true] %s298
          %301 = dma.vmem_to_hbm [thread:$0]  %s299, 128, %s296, %s285
        $region52: #{tpu_custom_call.1} parent=27 // pred_fallthru
          _
      $region28: #{tpu_custom_call.1} parent=5 // pred_fallthru
        _
      %p302 = scmp.le.s32.totalorder 2, %s17
      // Predicated region
      $region53: #{tpu_custom_call.1} parent=5 // pred_check
        %p303 = pneg %p302
      $region54: #{tpu_custom_call.1} parent=5 // pred_check_branch
        %305 = sbr.rel (%p303) target = $region56
      $region55: #{tpu_custom_call.1} parent=5 // pred_region
        %s306 = ssub.s32 %s17, 2
        // Predicated region
        $region57: #{tpu_custom_call.1} parent=55 // pred_check
          %p307 = pneg %p122
        $region58: #{tpu_custom_call.1} parent=55 // pred_check_branch
          %309 = sbr.rel (%p307) target = $region60
        $region59: #{tpu_custom_call.1} parent=55 // pred_region
          %s310 = sand.u32 %s107, 1
          %s311 = scalar_lea.sflag [#allocation5], %s310
          %s312 = sand.u32 %s107, 1
          %s313 = smul.addr %s312, 8
          %s314 = scalar_lea.vmem [#allocation8], %s313
          %315 = dma.done %s311, 128
        $region60: #{tpu_custom_call.1} parent=55 // pred_fallthru
          _
      $region56: #{tpu_custom_call.1} parent=5 // pred_fallthru
        _
    $region6: #{tpu_custom_call.1} parent=1 // loop_footer
      %s21 = sadd.s32 1, %s17
    $region7: #{tpu_custom_call.1} parent=1 // loop_footer_branch
      %16 = sbr.rel target = $region3
    $region8: #{tpu_custom_call.1} parent=1 // loop_exit
      _
    %316 = vsyncpa [#allocation4], 1
    %s317 = scalar_lea.sflag [#allocation4], 1
    %318 = vsyncpa %s317, 1
    %319 = vsyncpa [#allocation7], 1
    %s320 = scalar_lea.sflag [#allocation7], 1
    %321 = vsyncpa %s320, 1
    %322 = vsyncpa [#allocation5], 1
    %s323 = scalar_lea.sflag [#allocation5], 1
    %324 = vsyncpa %s323, 1

</llo_original>
